<compile_context>
chip_gen: v7x
topology: tpu7x:2x2x1
jax: 0.10.0
libtpu: 0.0.40
codegen_flags: <defaults>
</compile_context>

<pallas_src>
import math

import jax
import jax.numpy as jnp
from jax.experimental import pallas as pl
from jax.experimental.pallas import tpu as pltpu


def build_sincos_pe_2d(h: int, w: int, d_model: int) -> jnp.ndarray:
    """Build the (h*w, d_model) positional table, matching PyTorch __init__."""
    assert d_model % 4 == 0, (
        "d_model must be a multiple of 4 (emb_size = d_model//2 must be even) "
        "to match the PyTorch sin/cos interleaving."
    )
    emb_size = d_model // 2
    position_h = jnp.arange(h, dtype=jnp.float32)[:, None]          # (h, 1)
    position_w = jnp.arange(w, dtype=jnp.float32)[:, None]          # (w, 1)
    div_term = jnp.exp(
        jnp.arange(0, emb_size, 2, dtype=jnp.float32)
        * (-math.log(10000.0) / emb_size)
    )                                                                # (emb_size//2,)

    pe_h = jnp.zeros((h, emb_size), dtype=jnp.float32)
    pe_h = pe_h.at[:, 0::2].set(jnp.sin(position_h * div_term))
    pe_h = pe_h.at[:, 1::2].set(jnp.cos(position_h * div_term))

    pe_w = jnp.zeros((w, emb_size), dtype=jnp.float32)
    pe_w = pe_w.at[:, 0::2].set(jnp.sin(position_w * div_term))
    pe_w = pe_w.at[:, 1::2].set(jnp.cos(position_w * div_term))

    pe = jnp.concatenate(
        [
            jnp.broadcast_to(pe_h[:, None, :], (h, w, emb_size)),
            jnp.broadcast_to(pe_w[None, :, :], (h, w, emb_size)),
        ],
        axis=-1,
    )                                                                # (h, w, d_model)
    return pe.reshape(h * w, d_model)                                # (h*w, d_model)


def _add_pe_kernel(x_ref, pe_ref, o_ref):
    # Lane-dense path:  x (TB, TN)       + pe (1, TN)
    # Fallback path:    x (TB, THW, D)   + pe (THW, D)
    # The add broadcasts over the batch rows and promotes dtype (bf16+f32->f32),
    # matching PyTorch's `input + pe`.
    o_ref[...] = (x_ref[...] + pe_ref[...]).astype(o_ref.dtype)


_DEFAULT_TILE_BYTES = 2 * 1024 * 1024


def _generation_params():
    """(tile_bytes, vmem_limit_bytes) tuned per TPU generation."""
    try:
        kind = jax.devices()[0].device_kind.lower()
    except Exception:
        return _DEFAULT_TILE_BYTES, None
    if ("v6" in kind) or ("v7" in kind) or ("tpu7" in kind):
        # v6e/v7x: 4 MiB tiles amortize per-grid-step overhead against fast
        # HBM.  Double-buffered x + out + pe at 4 MiB tiles is ~17 MiB, inside
        # the 32 MiB scoped default and well under v7x's 64 MiB physical VMEM.
        return 4 * 1024 * 1024, 32 * 1024 * 1024
    # v5e / unknown: stay comfortably inside the 16 MiB scoped-VMEM default.
    return _DEFAULT_TILE_BYTES, None


def _batch_tile(B: int, x_itemsize: int) -> int:
    # Sublane-pack-aligned batch tile: 8 rows for f32, 16 for bf16, 32 for i8/fp8.
    pack = max(1, 4 // max(1, x_itemsize))
    base = 8 * pack
    return B if B <= base else base


def sincos_pos_embedding_2d(x: jnp.ndarray, pe: jnp.ndarray) -> jnp.ndarray:
    """x: (B, HW, D); pe: (HW, D). Returns x + pe[None, :, :] (promoted dtype)."""
    B, HW, D = x.shape
    assert pe.shape == (HW, D)

    out_dtype = jnp.promote_types(x.dtype, pe.dtype)   # match torch promotion
    out_isz = jnp.dtype(out_dtype).itemsize
    x_isz = jnp.dtype(x.dtype).itemsize

    tile_bytes, vmem_limit = _generation_params()
    TB = _batch_tile(B, x_isz)
    N = HW * D

    cparams = dict(dimension_semantics=("parallel", "parallel"))
    if vmem_limit is not None:
        cparams["vmem_limit_bytes"] = vmem_limit

    if N % 128 == 0:
        # ---- Lane-dense path: flatten trailing dims into one 128-aligned axis.
        x2 = x.reshape(B, N)
        pe2 = pe.reshape(1, N)

        target = max(128, (tile_bytes // out_isz) // TB)
        TN = min(N, max(128, (target // 128) * 128))
        # Guarantee >=2 blocks on the outer (column) axis for large tensors so
        # v7x's two TensorCores both get work.
        if TN >= N and N >= 256 and (B * N * out_isz) > (4 << 20):
            TN = max(128, ((N // 2) // 128) * 128)

        # Column axis OUTER, batch axis INNER: pe's block index (0, j) is
        # constant across inner steps, so its DMA is skipped -> pe streamed
        # from HBM exactly once per call.
        grid = (pl.cdiv(N, TN), pl.cdiv(B, TB))

        out2 = pl.pallas_call(
            _add_pe_kernel,
            out_shape=jax.ShapeDtypeStruct((B, N), out_dtype),
            grid_spec=pltpu.PrefetchScalarGridSpec(
                num_scalar_prefetch=0,
                grid=grid,
                in_specs=[
                    pl.BlockSpec((TB, TN), lambda j, i: (i, j)),
                    pl.BlockSpec((1, TN), lambda j, i: (0, j)),
                ],
                out_specs=pl.BlockSpec((TB, TN), lambda j, i: (i, j)),
            ),
            compiler_params=pltpu.CompilerParams(**cparams),
        )(x2, pe2)
        return out2.reshape(B, HW, D)

    # ---- Fallback: HW*D not 128-aligned.  Tile the 3-D view with the full D
    # extent (satisfies the lane constraint) and a bounded, 8-aligned HW tile
    # so VMEM stays bounded even for large unaligned inputs.
    if HW <= 8 or TB * HW * D * out_isz <= tile_bytes:
        THW = HW
    else:
        THW = min(HW, max(8, ((tile_bytes // (TB * D * out_isz)) // 8) * 8))

    grid = (pl.cdiv(HW, THW), pl.cdiv(B, TB))   # hw outer, batch inner

    out = pl.pallas_call(
        _add_pe_kernel,
        out_shape=jax.ShapeDtypeStruct((B, HW, D), out_dtype),
        grid_spec=pltpu.PrefetchScalarGridSpec(
            num_scalar_prefetch=0,
            grid=grid,
            in_specs=[
                pl.BlockSpec((TB, THW, D), lambda j, i: (i, j, 0)),
                pl.BlockSpec((THW, D), lambda j, i: (j, 0)),
            ],
            out_specs=pl.BlockSpec((TB, THW, D), lambda j, i: (i, j, 0)),
        ),
        compiler_params=pltpu.CompilerParams(**cparams),
    )(x, pe)
    return out


if __name__ == "__main__":
    key = jax.random.PRNGKey(0)

    # Test 1: lane-dense path (HW*D = 512, multiple of 128), small B.
    h, w, d_model = 4, 4, 32
    B = 2
    pe = build_sincos_pe_2d(h, w, d_model)                      # (16, 32)
    key, sub = jax.random.split(key)
    x = jax.random.normal(sub, (B, h * w, d_model), dtype=jnp.float32)
    out = jax.block_until_ready(sincos_pos_embedding_2d(x, pe))
    ref = x + pe[None, :, :]
    assert out.shape == ref.shape and out.dtype == ref.dtype
    assert jnp.allclose(out, ref, atol=1e-6), "mismatch vs reference (test 1)"

    # Test 2: non-128-aligned fallback (HW*D = 120) + batch tiling (B=16 > TB=8).
    h2, w2, d2 = 2, 3, 20
    B2 = 16
    pe2 = build_sincos_pe_2d(h2, w2, d2)                        # (6, 20)
    key, sub = jax.random.split(key)
    x2 = jax.random.normal(sub, (B2, h2 * w2, d2), dtype=jnp.float32)
    out2 = jax.block_until_ready(sincos_pos_embedding_2d(x2, pe2))
    ref2 = x2 + pe2[None, :, :]
    assert jnp.allclose(out2, ref2, atol=1e-6), "mismatch vs reference (test 2)"

    # Test 3: bf16 input + f32 table -> promoted f32 output (torch-style).
    h3, w3, d3 = 4, 8, 64
    B3 = 4
    pe3 = build_sincos_pe_2d(h3, w3, d3)                        # (32, 64)
    key, sub = jax.random.split(key)
    x3 = jax.random.normal(sub, (B3, h3 * w3, d3), dtype=jnp.bfloat16)
    out3 = jax.block_until_ready(sincos_pos_embedding_2d(x3, pe3))
    ref3 = x3.astype(jnp.float32) + pe3[None, :, :]
    assert out3.dtype == jnp.float32
    assert jnp.allclose(out3, ref3, atol=1e-5), "mismatch vs reference (test 3)"

    print("KERNEL_OK")
</pallas_src>

<mosaic_0001>
module attributes {stable_mosaic.version = 11 : i64} {
  func.func @_add_pe_kernel(%arg0: i32, %arg1: i32, %arg2: memref<2x512xf32, #tpu.memory_space<vmem>>, %arg3: memref<1x512xf32, #tpu.memory_space<vmem>>, %arg4: memref<2x512xf32, #tpu.memory_space<vmem>>) attributes {dimension_semantics = [#tpu.dimension_semantics<parallel>, #tpu.dimension_semantics<parallel>], iteration_bounds = array<i64: 1, 1>, scalar_prefetch = 0 : i64, scratch_operands = 0 : i64, tpu.core_type = #tpu.core_type<tc>, window_params = [{transform_indices = @transform_0, window_bounds = array<i64: 2, 512>}, {transform_indices = @transform_1, window_bounds = array<i64: 1, 512>}, {transform_indices = @transform_2, window_bounds = array<i64: 2, 512>}]} {
    %c0 = arith.constant 0 : index
    %c0_0 = arith.constant 0 : index
    %0 = vector.load %arg2[%c0, %c0_0] : memref<2x512xf32, #tpu.memory_space<vmem>>, vector<2x512xf32>
    %c0_1 = arith.constant 0 : index
    %c0_2 = arith.constant 0 : index
    %1 = vector.load %arg3[%c0_1, %c0_2] : memref<1x512xf32, #tpu.memory_space<vmem>>, vector<1x512xf32>
    %2 = vector.broadcast %1 : vector<1x512xf32> to vector<2x512xf32>
    %3 = arith.addf %0, %2 : vector<2x512xf32>
    %c0_3 = arith.constant 0 : index
    %c0_4 = arith.constant 0 : index
    %4 = vector.load %arg4[%c0_3, %c0_4] : memref<2x512xf32, #tpu.memory_space<vmem>>, vector<2x512xf32>
    tpu.vector_store %arg4[%c0_3, %c0_4], %3 {strides = array<i32>} : memref<2x512xf32, #tpu.memory_space<vmem>>, vector<2x512xf32>,
    return
  }
  func.func @transform_0(%arg0: i32, %arg1: i32) -> (i32, i32) {
    %c0_i32 = arith.constant 0 : i32
    return %arg1, %arg0 : i32, i32
  }
  func.func @transform_1(%arg0: i32, %arg1: i32) -> (i32, i32) {
    %c0_i32 = arith.constant 0 : i32
    %c0_i32_0 = arith.constant 0 : i32
    return %c0_i32, %arg0 : i32, i32
  }
  func.func @transform_2(%arg0: i32, %arg1: i32) -> (i32, i32) {
    %c0_i32 = arith.constant 0 : i32
    return %arg1, %arg0 : i32, i32
  }
}

</mosaic_0001>

<llo_original>
// kernel: tpu_custom_call.1
$region0: #{tpu_custom_call.1}
  #allocation0 [shape = 'u32[]', space=smem, size = 0x4, offset = 0x4, fixed_abs, tag = 'smem constant byte address 0x4 - core index']
  #allocation1 [shape = 'u32[144,128]{1,0:T(1,128)}', space=vmem, size = 0x12000, scoped, tag = 'internal scratch']
  %s0 = inlined_call_operand.hbm [shape: f32[2,512], index: 0, kind: input, shape index: {}]
  %s1 = inlined_call_operand.hbm [shape: f32[1,512], index: 1, kind: input, shape index: {}]
  %s2 = inlined_call_operand.hbm [shape: f32[2,512], index: 2, kind: output, shape index: {}]
  %s3 = sld [smem:[#allocation0]]
  $region26: #{tpu_custom_call.1} parent=0
    _
  %s5 = ssub.s32 1, %s3
  %s6 = scalar_select 0, %s5, %s3
  $region1: #{tpu_custom_call.1} parent=0
    #allocation2 [shape = 'u8[4096]{0}', space=vmem, size = 0x1000, scoped, tag = 'input window, operand 0, single buffered']
    #allocation3 [shape = 's32[1]{0}', space=sflag, size = 0x4, scoped, tag = 'scoped memory for tpu_custom_call.1']
    #allocation4 [shape = 's32[1]{0}', space=sflag, size = 0x4, scoped, tag = 'scoped memory for tpu_custom_call.1']
    #allocation5 [shape = 'u8[2048]{0}', space=vmem, size = 0x800, scoped, tag = 'input window, operand 1, single buffered']
    #allocation6 [shape = 's32[1]{0}', space=sflag, size = 0x4, scoped, tag = 'scoped memory for tpu_custom_call.1']
    #allocation7 [shape = 'u8[4096]{0}', space=vmem, size = 0x1000, scoped, tag = 'output window, operand 0, single buffered']
    %7 = vsyncpa [#allocation3], 0
    %8 = vsyncpa [#allocation6], 0
    %9 = vsyncpa [#allocation4], 0
    // Predicated region
    $region2: #{tpu_custom_call.1} parent=1 // pred_check
      _
    $region3: #{tpu_custom_call.1} parent=1 // pred_check_branch
      %11 = sbr.rel (0) target = $region5
    $region4: #{tpu_custom_call.1} parent=1 // pred_region
      %s13 = ssub.s32 128, 128
      %14 = vsyncadd [#allocation3], %s13
      %s16 = sshll.u32 [#allocation2], 4
      %s17 = int_to_ptr.vmem [resolvable:$true] %s16
      %19 = dma.hbm_to_vmem [thread:$0]  %s0, 128, %s17, [#allocation3]
    $region5: #{tpu_custom_call.1} parent=1 // pred_fallthru
      _
    // Predicated region
    $region6: #{tpu_custom_call.1} parent=1 // pred_check
      _
    $region7: #{tpu_custom_call.1} parent=1 // pred_check_branch
      %21 = sbr.rel (0) target = $region9
    $region8: #{tpu_custom_call.1} parent=1 // pred_region
      %s23 = ssub.s32 64, 64
      %24 = vsyncadd [#allocation6], %s23
      %s26 = sshll.u32 [#allocation5], 4
      %s27 = int_to_ptr.vmem [resolvable:$true] %s26
      %29 = dma.hbm_to_vmem [thread:$0]  %s1, 64, %s27, [#allocation6]
    $region9: #{tpu_custom_call.1} parent=1 // pred_fallthru
      _
    // Predicated region
    $region10: #{tpu_custom_call.1} parent=1 // pred_check
      _
    $region11: #{tpu_custom_call.1} parent=1 // pred_check_branch
      %31 = sbr.rel (0) target = $region13
    $region12: #{tpu_custom_call.1} parent=1 // pred_region
      %32 = dma.done [#allocation3], 128
    $region13: #{tpu_custom_call.1} parent=1 // pred_fallthru
      _
    // Predicated region
    $region14: #{tpu_custom_call.1} parent=1 // pred_check
      _
    $region15: #{tpu_custom_call.1} parent=1 // pred_check_branch
      %34 = sbr.rel (0) target = $region17
    $region16: #{tpu_custom_call.1} parent=1 // pred_region
      %35 = dma.done [#allocation6], 64
    $region17: #{tpu_custom_call.1} parent=1 // pred_fallthru
      _
    %v36 = vld [vmem:[#allocation2] sm:$0xff]
    %v37 = vld [vmem:[#allocation5] sm:$0xf]
    %v39 = vlaneseq
    %v40 = vshrl.u32 %v39, 7
    %v41 = vsub.s32 0, %v40
    %v42 = vrot.slane %v37, %v41
    %v43 = vlaneseq
    %v44 = vshrl.u32 %v43, 7
    %v45 = vsub.s32 1, %v44
    %v46 = vrot.slane %v37, %v45
    %v47 = vlaneseq
    %v48 = vshrl.u32 %v47, 7
    %v49 = vsub.s32 2, %v48
    %v50 = vrot.slane %v37, %v49
    %v51 = vlaneseq
    %v52 = vshrl.u32 %v51, 7
    %v53 = vsub.s32 3, %v52
    %v54 = vrot.slane %v37, %v53
    %v55 = vcombine.low %v42, %v46
    %v56 = vcombine.low %v50, %v54
    %v58 = vunpack.c.l.s4 1983009808
    %v59 = vunpack.c.0.s8 %v58
    %v60 = vlaneseq
    %v61 = vshrl.u32 %v60, 7
    %v62 = vsub.s32 %v59, %v61
    %v63 = vrot.slane %v55, %v62
    %v65 = vunpack.c.l.s4 1983009808
    %v66 = vunpack.c.0.s8 %v65
    %v67 = vlaneseq
    %v68 = vshrl.u32 %v67, 7
    %v69 = vsub.s32 %v66, %v68
    %v70 = vrot.slane %v56, %v69
    %v71 = vcombine.low %v63, %v70
    %v73 = vadd.f32 %v36, %v71
    %74 = vst [vmem:[#allocation7] sm:$0xff] %v73
    // Predicated region
    $region18: #{tpu_custom_call.1} parent=1 // pred_check
      _
    $region19: #{tpu_custom_call.1} parent=1 // pred_check_branch
      %76 = sbr.rel (0) target = $region21
    $region20: #{tpu_custom_call.1} parent=1 // pred_region
      %s78 = ssub.s32 128, 128
      %79 = vsyncadd [#allocation4], %s78
      %s81 = sshll.u32 [#allocation7], 4
      %s82 = int_to_ptr.vmem [resolvable:$true] %s81
      %84 = dma.vmem_to_hbm [thread:$0]  %s82, 128, %s2, [#allocation4]
    $region21: #{tpu_custom_call.1} parent=1 // pred_fallthru
      _
    // Predicated region
    $region22: #{tpu_custom_call.1} parent=1 // pred_check
      _
    $region23: #{tpu_custom_call.1} parent=1 // pred_check_branch
      %86 = sbr.rel (0) target = $region25
    $region24: #{tpu_custom_call.1} parent=1 // pred_region
      %87 = dma.done [#allocation4], 128
    $region25: #{tpu_custom_call.1} parent=1 // pred_fallthru
      _
    %88 = vsyncpa [#allocation3], 1
    %89 = vsyncpa [#allocation6], 1
    %90 = vsyncpa [#allocation4], 1

</llo_original>
